<compile_context>
chip_gen: v6e
topology: v6e:2x2x1
jax: 0.10.0
libtpu: 0.0.40
codegen_flags: <defaults>
</compile_context>

<pallas_src>
import numpy as np
import jax
import jax.numpy as jnp
from jax import lax
from jax.experimental import pallas as pl
from jax.experimental.pallas import tpu as pltpu

C_IN, C_MID, C_OUT = 3, 3, 5
H = W = 16
K1, STR1, PAD1 = 3, 3, 4
H1 = (H + 2 * PAD1 - K1) // STR1 + 1          # 8   conv1 output spatial
KP, PADP = 3, 5
HP = H1 + 2 * PADP - KP + 1                   # 16  max-pool / final spatial
NSLOT = 16                                    # slot grid per channel (= HP)
SLOT_OFF = 4                                  # conv output oh lives at slot oh+4
D_IN = C_IN * H * W                           # 768 flattened input per element
D_MID = C_MID * NSLOT * NSLOT                 # 768 slot-grid lanes
D_OUT = HP * HP                               # 256 flattened output per element
N_PACK = 128                                  # packed live columns (108 -> 128)
NEG = -1e30                                   # finite "-inf" for pool padding


def model2_kernel(x_ref, a_ref, s_ref, off_ref, scal_ref, out_ref):
    # x_ref  : (B_TILE, 768)   flattened NCHW input rows
    # a_ref  : (768, 128)      conv1 restricted to the 108 live slot columns
    # s_ref  : (128, 768)      0/1 scatter of packed columns into the slot grid
    # off_ref: (1, 768)        per-slot affine offset; NEG at pad slots
    # scal   : (4,) SMEM       [w2_mean[0..2], b2_mean]
    # out_ref: (B_TILE, 256)   flattened (16,16) output per element
    x = x_ref[...]

    # conv1 (3x3, stride 3, pad 4) + bias + other1 + other2-term as a packed
    # matmul followed by an exact 0/1 scatter onto the 16x16 slot grid per
    # channel (lane = co*256 + rs*16 + cs).
    p = jnp.dot(x, a_ref[...], preferred_element_type=jnp.float32)
    y = jnp.dot(p, s_ref[...], preferred_element_type=jnp.float32) + off_ref[...]

    # max_pool2d(k=3, stride=1, pad=5): window = slots [p-1, p+1] on each axis.
    # Column direction (+-1 lane), then row direction (+-16 lanes).  Both
    # directions are taken so the result is independent of the roll convention;
    # wrapped-in lanes are always NEG pad slots.  (Shifts D_MID-1 / D_MID-16
    # are the modulo-equivalent of -1 / -16 lane rotates.)
    y = jnp.maximum(y, jnp.maximum(pltpu.roll(y, 1, axis=1),
                                   pltpu.roll(y, D_MID - 1, axis=1)))
    y = jnp.maximum(y, jnp.maximum(pltpu.roll(y, NSLOT, axis=1),
                                   pltpu.roll(y, D_MID - NSLOT, axis=1)))

    # conv2 (1x1, 3->5) + mean over output channels, folded to a 3-tap sum.
    c0 = scal_ref[0]
    c1 = scal_ref[1]
    c2 = scal_ref[2]
    b2m = scal_ref[3]
    out_ref[...] = (c0 * y[:, 0:D_OUT]
                    + c1 * y[:, D_OUT:2 * D_OUT]
                    + c2 * y[:, 2 * D_OUT:3 * D_OUT]
                    + b2m)


def _conv_selector():
    """0/1 selector sel[k, i, slot]: input row i feeds conv tap k of the conv
    output row living at `slot` (= oh + SLOT_OFF)."""
    sel = np.zeros((K1, H, NSLOT), np.float32)
    for oh in range(H1):
        for k in range(K1):
            i = STR1 * oh - PAD1 + k
            if 0 <= i < H:
                sel[k, i, oh + SLOT_OFF] = 1.0
    return sel


def fold_params(params, other1=1.0, other2=1.0):
    """Host-side (numpy), once per parameter set: builds the packed conv map,
    the 0/1 scatter, the per-slot offsets and the folded conv2+mean scalars."""
    w1 = np.asarray(params[0], np.float32)
    b1 = np.asarray(params[1], np.float32)
    w2 = np.asarray(params[2], np.float32)
    b2 = np.asarray(params[3], np.float32)

    sel = _conv_selector()                                   # (3, 16, 16)
    # dense conv1 linear map (768 -> 768) onto the slot grid
    m6 = np.einsum('oikl,khr,lwc->ihworc', w1, sel, sel)
    m3 = m6.reshape(D_IN, D_MID)

    # structurally live slot columns: slots receiving at least one input tap
    slot_live = np.where(sel.sum(axis=(0, 1)) > 0)[0]        # rows/cols 5..10
    live_cols = np.array(
        [co * NSLOT * NSLOT + r * NSLOT + c
         for co in range(C_MID) for r in slot_live for c in slot_live],
        np.int64)
    n_live = live_cols.size                                  # 108
    assert n_live <= N_PACK

    a_packed = np.zeros((D_IN, N_PACK), np.float32)
    a_packed[:, :n_live] = m3[:, live_cols]
    s_scatter = np.zeros((N_PACK, D_MID), np.float32)
    s_scatter[np.arange(n_live), live_cols] = 1.0

    # per-slot offset: b1 + other1 + other2 * (sum of in-bounds taps);
    # NEG at pad slots realizes the max-pool's -inf padding.
    vh = sel.sum(axis=1)                                     # (3, 16) 0/1
    s_sum = np.einsum('oikl,kr,lc->orc', w1, vh, vh)         # (3, 16, 16)
    slot_mask = np.zeros((NSLOT, NSLOT), bool)
    slot_mask[SLOT_OFF:SLOT_OFF + H1, SLOT_OFF:SLOT_OFF + H1] = True
    off3 = b1[:, None, None] + float(other1) + float(other2) * s_sum
    off3 = np.where(slot_mask[None], off3, np.float32(NEG))
    off = off3.reshape(1, D_MID).astype(np.float32)

    # folded conv2 + channel mean
    w2m = w2.reshape(C_OUT, C_MID).mean(axis=0)              # (3,)
    scal = np.concatenate([w2m, [b2.mean()]]).astype(np.float32)

    return (jnp.asarray(a_packed), jnp.asarray(s_scatter),
            jnp.asarray(off), jnp.asarray(scal))


def _pick_tile(n):
    """Batch-tile rows: tiny N -> one minimal tile; medium N -> two tiles so
    both v7x TensorCores get a grid step; large N -> 512-row tiles."""
    rows = -(-n // 8) * 8
    if rows <= 16:
        return rows
    if rows <= 1024:
        half = -(-rows // 2)
        return -(-half // 8) * 8
    return 512


def model2_forward(x1, x2, consts):
    del x2  # unused, same as the PyTorch module
    a_packed, s_scatter, off, scal = consts
    N = x1.shape[0]

    x_flat = x1.reshape(N, D_IN).astype(jnp.float32)
    b_tile = _pick_tile(N)
    n_total = -(-N // b_tile) * b_tile
    if n_total != N:
        x_flat = jnp.pad(x_flat, ((0, n_total - N), (0, 0)))

    out = pl.pallas_call(
        model2_kernel,
        out_shape=jax.ShapeDtypeStruct((n_total, D_OUT), jnp.float32),
        grid=(n_total // b_tile,),
        in_specs=[
            pl.BlockSpec((b_tile, D_IN), lambda n: (n, 0)),      # x
            pl.BlockSpec((D_IN, N_PACK), lambda n: (0, 0)),      # packed conv map
            pl.BlockSpec((N_PACK, D_MID), lambda n: (0, 0)),     # 0/1 scatter
            pl.BlockSpec((1, D_MID), lambda n: (0, 0)),          # slot offsets
            pl.BlockSpec(memory_space=pltpu.MemorySpace.SMEM),   # scalars
        ],
        out_specs=pl.BlockSpec((b_tile, D_OUT), lambda n: (n, 0)),
        compiler_params=pltpu.CompilerParams(
            dimension_semantics=("parallel",),
            vmem_limit_bytes=24 * 1024 * 1024),
    )(x_flat, a_packed, s_scatter, off, scal)

    return out[:N].reshape(N, 1, HP, HP)


def model2_reference(x1, params, other1=1.0, other2=1.0):
    """Pure-JAX reference with identical (generalized) semantics."""
    w1, b1, w2, b2 = params
    v1 = x1 + other2
    v2 = lax.conv_general_dilated(
        v1, w1, (STR1, STR1), ((PAD1, PAD1), (PAD1, PAD1)),
        dimension_numbers=("NCHW", "OIHW", "NCHW"),
        precision=lax.Precision.HIGHEST)
    v3 = v2 + b1[None, :, None, None] + other1
    v3p = jnp.pad(v3, ((0, 0), (0, 0), (PADP, PADP), (PADP, PADP)),
                  constant_values=-jnp.inf)
    v4 = lax.reduce_window(v3p, -jnp.inf, lax.max,
                           (1, 1, KP, KP), (1, 1, 1, 1), "VALID")
    v5 = lax.conv_general_dilated(
        v4, w2, (1, 1), "VALID",
        dimension_numbers=("NCHW", "OIHW", "NCHW"),
        precision=lax.Precision.HIGHEST)
    v5 = v5 + b2[None, :, None, None]
    return jnp.mean(v5, axis=1, keepdims=True)


def init_params():
    key = jax.random.PRNGKey(0)
    k1, k2, k3, k4 = jax.random.split(key, 4)
    s1 = 1.0 / np.sqrt(C_IN * K1 * K1)
    s2 = 1.0 / np.sqrt(C_MID)
    w1 = jax.random.uniform(k1, (C_MID, C_IN, K1, K1), jnp.float32, -s1, s1)
    b1 = jax.random.uniform(k2, (C_MID,), jnp.float32, -s1, s1)
    w2 = jax.random.uniform(k3, (C_OUT, C_MID, 1, 1), jnp.float32, -s2, s2)
    b2 = jax.random.uniform(k4, (C_OUT,), jnp.float32, -s2, s2)
    return w1, b1, w2, b2


def _check(out, ref):
    # max_pool2d padding=5 > kernel//2 would be rejected by PyTorch; with the
    # generalized (-inf padded) semantics the 3-wide output border is garbage
    # by construction -> compare the finite 10x10 interior only.
    a = out[:, :, 3:13, 3:13]
    b = ref[:, :, 3:13, 3:13]
    assert bool(jnp.all(jnp.isfinite(a))) and bool(jnp.all(jnp.isfinite(b)))
    err = float(jnp.max(jnp.abs(a - b)))
    assert bool(jnp.allclose(a, b, atol=1e-3, rtol=1e-3)), err


if __name__ == "__main__":
    params = init_params()
    consts = fold_params(params, other1=1.0, other2=1.0)  # hoisted, once
    fwd = jax.jit(model2_forward)

    # small-batch path (N=2 -> 8-row tile, grid=1)
    kx1, kx2 = jax.random.split(jax.random.PRNGKey(0), 2)
    x1 = jax.random.normal(kx1, (2, C_IN, H, W), jnp.float32)
    x2 = jax.random.normal(kx2, (2, C_IN, H, W), jnp.float32)  # unused
    out = jax.block_until_ready(fwd(x1, x2, consts))
    assert out.shape == (2, 1, HP, HP), out.shape
    _check(out, model2_reference(x1, params, other1=1.0, other2=1.0))

    # multi-tile path (N=200 -> two 104-row tiles, exercises batch padding)
    kx3 = jax.random.PRNGKey(1)
    x1b = jax.random.normal(kx3, (200, C_IN, H, W), jnp.float32)
    outb = jax.block_until_ready(fwd(x1b, x1b, consts))
    assert outb.shape == (200, 1, HP, HP), outb.shape
    _check(outb, model2_reference(x1b, params, other1=1.0, other2=1.0))

    print("KERNEL_OK")
</pallas_src>

<mosaic_0001>
module attributes {stable_mosaic.version = 11 : i64} {
  func.func @model2_kernel(%arg0: i32, %arg1: memref<8x768xf32, #tpu.memory_space<vmem>>, %arg2: memref<768x128xf32, #tpu.memory_space<vmem>>, %arg3: memref<128x768xf32, #tpu.memory_space<vmem>>, %arg4: memref<1x768xf32, #tpu.memory_space<vmem>>, %arg5: memref<4xf32, #tpu.memory_space<smem>>, %arg6: memref<8x256xf32, #tpu.memory_space<vmem>>) attributes {dimension_semantics = [#tpu.dimension_semantics<parallel>], iteration_bounds = array<i64: 1>, scalar_prefetch = 0 : i64, scratch_operands = 0 : i64, tpu.core_type = #tpu.core_type<tc>, window_params = [{transform_indices = @transform_0, window_bounds = array<i64: 8, 768>}, {pipeline_mode = #tpu.pipeline_mode<synchronous>, transform_indices = @transform_1, window_bounds = array<i64: 768, 128>}, {pipeline_mode = #tpu.pipeline_mode<synchronous>, transform_indices = @transform_2, window_bounds = array<i64: 128, 768>}, {pipeline_mode = #tpu.pipeline_mode<synchronous>, transform_indices = @transform_3, window_bounds = array<i64: 1, 768>}, {transform_indices = @transform_4, window_bounds = array<i64: 4>}, {transform_indices = @transform_5, window_bounds = array<i64: 8, 256>}]} {
    %c0 = arith.constant 0 : index
    %c0_0 = arith.constant 0 : index
    %0 = vector.load %arg1[%c0, %c0_0] : memref<8x768xf32, #tpu.memory_space<vmem>>, vector<8x768xf32>
    %c0_1 = arith.constant 0 : index
    %c0_2 = arith.constant 0 : index
    %1 = vector.load %arg2[%c0_1, %c0_2] : memref<768x128xf32, #tpu.memory_space<vmem>>, vector<768x128xf32>
    %cst = arith.constant dense<0.000000e+00> : vector<8x128xf32>
    %2 = tpu.matmul %0, %1, %cst {dimension_numbers = #tpu.dot_dimension_numbers<[1], [0], [0], [1], [0, 0, 1, 1], [], []>} : vector<8x768xf32>, vector<768x128xf32>, vector<8x128xf32> -> vector<8x128xf32>
    %c0_3 = arith.constant 0 : index
    %c0_4 = arith.constant 0 : index
    %3 = vector.load %arg3[%c0_3, %c0_4] : memref<128x768xf32, #tpu.memory_space<vmem>>, vector<128x768xf32>
    %cst_5 = arith.constant dense<0.000000e+00> : vector<8x768xf32>
    %4 = tpu.matmul %2, %3, %cst_5 {dimension_numbers = #tpu.dot_dimension_numbers<[1], [0], [0], [1], [0, 0, 1, 1], [], []>} : vector<8x128xf32>, vector<128x768xf32>, vector<8x768xf32> -> vector<8x768xf32>
    %c0_6 = arith.constant 0 : index
    %c0_7 = arith.constant 0 : index
    %5 = vector.load %arg4[%c0_6, %c0_7] : memref<1x768xf32, #tpu.memory_space<vmem>>, vector<1x768xf32>
    %6 = vector.broadcast %5 : vector<1x768xf32> to vector<8x768xf32>
    %7 = arith.addf %4, %6 : vector<8x768xf32>
    %c1_i32 = arith.constant 1 : i32
    %8 = tpu.dynamic_rotate %7 by %c1_i32 dim 1 : vector<8x768xf32>, i32 -> vector<8x768xf32>
    %c767_i32 = arith.constant 767 : i32
    %9 = tpu.dynamic_rotate %7 by %c767_i32 dim 1 : vector<8x768xf32>, i32 -> vector<8x768xf32>
    %10 = arith.maximumf %8, %9 : vector<8x768xf32>
    %11 = arith.maximumf %7, %10 : vector<8x768xf32>
    %c16_i32 = arith.constant 16 : i32
    %12 = tpu.dynamic_rotate %11 by %c16_i32 dim 1 : vector<8x768xf32>, i32 -> vector<8x768xf32>
    %c752_i32 = arith.constant 752 : i32
    %13 = tpu.dynamic_rotate %11 by %c752_i32 dim 1 : vector<8x768xf32>, i32 -> vector<8x768xf32>
    %14 = arith.maximumf %12, %13 : vector<8x768xf32>
    %15 = arith.maximumf %11, %14 : vector<8x768xf32>
    %c0_8 = arith.constant 0 : index
    %16 = memref.load %arg5[%c0_8] : memref<4xf32, #tpu.memory_space<smem>>
    %c1 = arith.constant 1 : index
    %17 = memref.load %arg5[%c1] : memref<4xf32, #tpu.memory_space<smem>>
    %c2 = arith.constant 2 : index
    %18 = memref.load %arg5[%c2] : memref<4xf32, #tpu.memory_space<smem>>
    %c3 = arith.constant 3 : index
    %19 = memref.load %arg5[%c3] : memref<4xf32, #tpu.memory_space<smem>>
    %20 = vector.extract_strided_slice %15 {offsets = [0, 0], sizes = [8, 256], strides = [1, 1]} : vector<8x768xf32> to vector<8x256xf32>
    %21 = vector.broadcast %16 : f32 to vector<8x256xf32>
    %22 = arith.mulf %21, %20 : vector<8x256xf32>
    %23 = vector.extract_strided_slice %15 {offsets = [0, 256], sizes = [8, 256], strides = [1, 1]} : vector<8x768xf32> to vector<8x256xf32>
    %24 = vector.broadcast %17 : f32 to vector<8x256xf32>
    %25 = arith.mulf %24, %23 : vector<8x256xf32>
    %26 = arith.addf %22, %25 : vector<8x256xf32>
    %27 = vector.extract_strided_slice %15 {offsets = [0, 512], sizes = [8, 256], strides = [1, 1]} : vector<8x768xf32> to vector<8x256xf32>
    %28 = vector.broadcast %18 : f32 to vector<8x256xf32>
    %29 = arith.mulf %28, %27 : vector<8x256xf32>
    %30 = arith.addf %26, %29 : vector<8x256xf32>
    %31 = vector.broadcast %19 : f32 to vector<8x256xf32>
    %32 = arith.addf %30, %31 : vector<8x256xf32>
    %c0_9 = arith.constant 0 : index
    %c0_10 = arith.constant 0 : index
    %33 = vector.load %arg6[%c0_9, %c0_10] : memref<8x256xf32, #tpu.memory_space<vmem>>, vector<8x256xf32>
    tpu.vector_store %arg6[%c0_9, %c0_10], %32 {strides = array<i32>} : memref<8x256xf32, #tpu.memory_space<vmem>>, vector<8x256xf32>,
    return
  }
  func.func @transform_0(%arg0: i32) -> (i32, i32) {
    %c0_i32 = arith.constant 0 : i32
    %c0_i32_0 = arith.constant 0 : i32
    return %arg0, %c0_i32 : i32, i32
  }
  func.func @transform_1(%arg0: i32) -> (i32, i32) {
    %c0_i32 = arith.constant 0 : i32
    %c0_i32_0 = arith.constant 0 : i32
    %c0_i32_1 = arith.constant 0 : i32
    return %c0_i32, %c0_i32_0 : i32, i32
  }
  func.func @transform_2(%arg0: i32) -> (i32, i32) {
    %c0_i32 = arith.constant 0 : i32
    %c0_i32_0 = arith.constant 0 : i32
    %c0_i32_1 = arith.constant 0 : i32
    return %c0_i32, %c0_i32_0 : i32, i32
  }
  func.func @transform_3(%arg0: i32) -> (i32, i32) {
    %c0_i32 = arith.constant 0 : i32
    %c0_i32_0 = arith.constant 0 : i32
    %c0_i32_1 = arith.constant 0 : i32
    return %c0_i32, %c0_i32_0 : i32, i32
  }
  func.func @transform_4(%arg0: i32) -> i32 {
    %c0_i32 = arith.constant 0 : i32
    %c0_i32_0 = arith.constant 0 : i32
    return %c0_i32 : i32
  }
  func.func @transform_5(%arg0: i32) -> (i32, i32) {
    %c0_i32 = arith.constant 0 : i32
    %c0_i32_0 = arith.constant 0 : i32
    return %arg0, %c0_i32 : i32, i32
  }
}

</mosaic_0001>

<llo_original>
// kernel: model2_forward.1
$region0: #{model2_forward.1}
  #allocation0 [shape = 'u32[]', space=smem, size = 0x4, offset = 0x4, fixed_abs, tag = 'smem constant byte address 0x4 - core index']
  #allocation1 [shape = 'u32[144,128]{1,0:T(1,128)}', space=vmem, size = 0x12000, scoped, tag = 'internal scratch']
  %s0 = inlined_call_operand.vmem [shape: f32[8,768], index: 0, kind: input, shape index: {}]
  %s1 = inlined_call_operand.hbm [shape: f32[768,128], index: 1, kind: input, shape index: {}]
  %s2 = inlined_call_operand.hbm [shape: f32[128,768], index: 2, kind: input, shape index: {}]
  %s3 = inlined_call_operand.vmem [shape: f32[1,768], index: 3, kind: input, shape index: {}]
  %s4 = inlined_call_operand.vmem [shape: f32[4], index: 4, kind: input, shape index: {}]
  %s5 = inlined_call_operand.vmem [shape: f32[8,256], index: 5, kind: output, shape index: {}]
  %s6 = sld [smem:[#allocation0]]
  $region42: #{model2_forward.1} parent=0
    _
  %s8 = ssub.s32 1, %s6
  %s9 = scalar_select 0, %s8, %s6
  $region1: #{model2_forward.1} parent=0
    #allocation2 [shape = 'u8[393216]{0}', space=vmem, size = 0x60000, scoped, tag = 'input window, operand 1, single buffered']
    #allocation3 [shape = 's32[1]{0}', space=sflag, size = 0x4, scoped, tag = 'scoped memory for model2_forward.1']
    #allocation4 [shape = 's32[1]{0}', space=sflag, size = 0x4, scoped, tag = 'scoped memory for model2_forward.1']
    #allocation5 [shape = 'u8[393216]{0}', space=vmem, size = 0x60000, scoped, tag = 'input window, operand 2, single buffered']
    #allocation6 [shape = 's32[1]{0}', space=sflag, size = 0x4, scoped, tag = 'scoped memory for model2_forward.1']
    #allocation7 [shape = 'u8[512]{0}', space=smem, size = 0x200, scoped, tag = 'input window, operand 4, single buffered']
    %10 = vsyncpa [#allocation3], 0
    %11 = vsyncpa [#allocation6], 0
    %12 = vsyncpa [#allocation4], 0
    // Predicated region
    $region2: #{model2_forward.1} parent=1 // pred_check
      _
    $region3: #{model2_forward.1} parent=1 // pred_check_branch
      %14 = sbr.rel (0) target = $region5
    $region4: #{model2_forward.1} parent=1 // pred_region
      _
    $region5: #{model2_forward.1} parent=1 // pred_fallthru
      _
    // Predicated region
    $region6: #{model2_forward.1} parent=1 // pred_check
      _
    $region7: #{model2_forward.1} parent=1 // pred_check_branch
      %16 = sbr.rel (0) target = $region9
    $region8: #{model2_forward.1} parent=1 // pred_region
      %s18 = ssub.s32 12288, 12288
      %19 = vsyncadd [#allocation3], %s18
      %s20 = sshll.u32 [#allocation2], 4
      %s21 = int_to_ptr.vmem [resolvable:$true] %s20
      %26 = dma.hbm_to_vmem [thread:$0]  %s1, 12288, %s21, [#allocation3], 128, 128, 8
    $region9: #{model2_forward.1} parent=1 // pred_fallthru
      _
    // Predicated region
    $region10: #{model2_forward.1} parent=1 // pred_check
      _
    $region11: #{model2_forward.1} parent=1 // pred_check_branch
      %28 = sbr.rel (0) target = $region13
    $region12: #{model2_forward.1} parent=1 // pred_region
      %s30 = ssub.s32 12288, 12288
      %31 = vsyncadd [#allocation6], %s30
      %s32 = sshll.u32 [#allocation5], 4
      %s33 = int_to_ptr.vmem [resolvable:$true] %s32
      %38 = dma.hbm_to_vmem [thread:$0]  %s2, 12288, %s33, [#allocation6], 768, 768, 48
    $region13: #{model2_forward.1} parent=1 // pred_fallthru
      _
    // Predicated region
    $region14: #{model2_forward.1} parent=1 // pred_check
      _
    $region15: #{model2_forward.1} parent=1 // pred_check_branch
      %40 = sbr.rel (0) target = $region17
    $region16: #{model2_forward.1} parent=1 // pred_region
      _
    $region17: #{model2_forward.1} parent=1 // pred_fallthru
      _
    // Predicated region
    $region18: #{model2_forward.1} parent=1 // pred_check
      _
    $region19: #{model2_forward.1} parent=1 // pred_check_branch
      %42 = sbr.rel (0) target = $region21
    $region20: #{model2_forward.1} parent=1 // pred_region
      %s44 = ssub.s32 16, 16
      %45 = vsyncadd [#allocation4], %s44
      %s47 = sshll.u32 %s4, 4
      %s48 = int_to_ptr.vmem [resolvable:$true] %s47
      %50 = dma.vmem_to_smem %s48, 16, [#allocation7], [#allocation4]
    $region21: #{model2_forward.1} parent=1 // pred_fallthru
      _
    // Predicated region
    $region22: #{model2_forward.1} parent=1 // pred_check
      _
    $region23: #{model2_forward.1} parent=1 // pred_check_branch
      %52 = sbr.rel (0) target = $region25
    $region24: #{model2_forward.1} parent=1 // pred_region
      %53 = dma.done [#allocation3], 12288
    $region25: #{model2_forward.1} parent=1 // pred_fallthru
      _
    // Predicated region
    $region26: #{model2_forward.1} parent=1 // pred_check
      _
    $region27: #{model2_forward.1} parent=1 // pred_check_branch
      %55 = sbr.rel (0) target = $region29
    $region28: #{model2_forward.1} parent=1 // pred_region
      %56 = dma.done [#allocation6], 12288
    $region29: #{model2_forward.1} parent=1 // pred_fallthru
      _
    // Predicated region
    $region30: #{model2_forward.1} parent=1 // pred_check
      _
    $region31: #{model2_forward.1} parent=1 // pred_check_branch
      %58 = sbr.rel (0) target = $region33
    $region32: #{model2_forward.1} parent=1 // pred_region
      %59 = dma.done [#allocation4], 16
    $region33: #{model2_forward.1} parent=1 // pred_fallthru
      _
    %60 = sfence
    %v61 = vld [vmem:[%s0] sm:$0xff]
    %v62 = vld [vmem:[%s0 + $0x8] sm:$0xff]
    %v63 = vld [vmem:[%s0 + $0x10] sm:$0xff]
    %v64 = vld [vmem:[%s0 + $0x18] sm:$0xff]
    %v65 = vld [vmem:[%s0 + $0x20] sm:$0xff]
    %v66 = vld [vmem:[%s0 + $0x28] sm:$0xff]
    %v67 = vld [vmem:[#allocation2] sm:$0xff]
    %v68 = vld [vmem:[#allocation2 + $0x8] sm:$0xff]
    %v69 = vld [vmem:[#allocation2 + $0x10] sm:$0xff]
    %v70 = vld [vmem:[#allocation2 + $0x18] sm:$0xff]
    %v71 = vld [vmem:[#allocation2 + $0x20] sm:$0xff]
    %v72 = vld [vmem:[#allocation2 + $0x28] sm:$0xff]
    %v73 = vld [vmem:[#allocation2 + $0x30] sm:$0xff]
    %v74 = vld [vmem:[#allocation2 + $0x38] sm:$0xff]
    %v75 = vld [vmem:[#allocation2 + $0x40] sm:$0xff]
    %v76 = vld [vmem:[#allocation2 + $0x48] sm:$0xff]
    %v77 = vld [vmem:[#allocation2 + $0x50] sm:$0xff]
    %v78 = vld [vmem:[#allocation2 + $0x58] sm:$0xff]
    %v79 = vld [vmem:[#allocation2 + $0x60] sm:$0xff]
    %v80 = vld [vmem:[#allocation2 + $0x68] sm:$0xff]
    %v81 = vld [vmem:[#allocation2 + $0x70] sm:$0xff]
    %v82 = vld [vmem:[#allocation2 + $0x78] sm:$0xff]
    %v83 = vld [vmem:[#allocation2 + $0x80] sm:$0xff]
    %v84 = vld [vmem:[#allocation2 + $0x88] sm:$0xff]
    %v85 = vld [vmem:[#allocation2 + $0x90] sm:$0xff]
    %v86 = vld [vmem:[#allocation2 + $0x98] sm:$0xff]
    %v87 = vld [vmem:[#allocation2 + $0xa0] sm:$0xff]
    %v88 = vld [vmem:[#allocation2 + $0xa8] sm:$0xff]
    %v89 = vld [vmem:[#allocation2 + $0xb0] sm:$0xff]
    %v90 = vld [vmem:[#allocation2 + $0xb8] sm:$0xff]
    %v91 = vld [vmem:[#allocation2 + $0xc0] sm:$0xff]
    %v92 = vld [vmem:[#allocation2 + $0xc8] sm:$0xff]
    %v93 = vld [vmem:[#allocation2 + $0xd0] sm:$0xff]
    %v94 = vld [vmem:[#allocation2 + $0xd8] sm:$0xff]
    %v95 = vld [vmem:[#allocation2 + $0xe0] sm:$0xff]
    %v96 = vld [vmem:[#allocation2 + $0xe8] sm:$0xff]
    %v97 = vld [vmem:[#allocation2 + $0xf0] sm:$0xff]
    %v98 = vld [vmem:[#allocation2 + $0xf8] sm:$0xff]
    %v99 = vld [vmem:[#allocation2 + $0x100] sm:$0xff]
    %v100 = vld [vmem:[#allocation2 + $0x108] sm:$0xff]
    %v101 = vld [vmem:[#allocation2 + $0x110] sm:$0xff]
    %v102 = vld [vmem:[#allocation2 + $0x118] sm:$0xff]
    %v103 = vld [vmem:[#allocation2 + $0x120] sm:$0xff]
    %v104 = vld [vmem:[#allocation2 + $0x128] sm:$0xff]
    %v105 = vld [vmem:[#allocation2 + $0x130] sm:$0xff]
    %v106 = vld [vmem:[#allocation2 + $0x138] sm:$0xff]
    %v107 = vld [vmem:[#allocation2 + $0x140] sm:$0xff]
    %v108 = vld [vmem:[#allocation2 + $0x148] sm:$0xff]
    %v109 = vld [vmem:[#allocation2 + $0x150] sm:$0xff]
    %v110 = vld [vmem:[#allocation2 + $0x158] sm:$0xff]
    %v111 = vld [vmem:[#allocation2 + $0x160] sm:$0xff]
    %v112 = vld [vmem:[#allocation2 + $0x168] sm:$0xff]
    %v113 = vld [vmem:[#allocation2 + $0x170] sm:$0xff]
    %v114 = vld [vmem:[#allocation2 + $0x178] sm:$0xff]
    %v115 = vld [vmem:[#allocation2 + $0x180] sm:$0xff]
    %v116 = vld [vmem:[#allocation2 + $0x188] sm:$0xff]
    %v117 = vld [vmem:[#allocation2 + $0x190] sm:$0xff]
    %v118 = vld [vmem:[#allocation2 + $0x198] sm:$0xff]
    %v119 = vld [vmem:[#allocation2 + $0x1a0] sm:$0xff]
    %v120 = vld [vmem:[#allocation2 + $0x1a8] sm:$0xff]
    %v121 = vld [vmem:[#allocation2 + $0x1b0] sm:$0xff]
    %v122 = vld [vmem:[#allocation2 + $0x1b8] sm:$0xff]
    %v123 = vld [vmem:[#allocation2 + $0x1c0] sm:$0xff]
    %v124 = vld [vmem:[#allocation2 + $0x1c8] sm:$0xff]
    %v125 = vld [vmem:[#allocation2 + $0x1d0] sm:$0xff]
    %v126 = vld [vmem:[#allocation2 + $0x1d8] sm:$0xff]
    %v127 = vld [vmem:[#allocation2 + $0x1e0] sm:$0xff]
    %v128 = vld [vmem:[#allocation2 + $0x1e8] sm:$0xff]
    %v129 = vld [vmem:[#allocation2 + $0x1f0] sm:$0xff]
    %v130 = vld [vmem:[#allocation2 + $0x1f8] sm:$0xff]
    %v131 = vld [vmem:[#allocation2 + $0x200] sm:$0xff]
    %v132 = vld [vmem:[#allocation2 + $0x208] sm:$0xff]
    %v133 = vld [vmem:[#allocation2 + $0x210] sm:$0xff]
    %v134 = vld [vmem:[#allocation2 + $0x218] sm:$0xff]
    %v135 = vld [vmem:[#allocation2 + $0x220] sm:$0xff]
    %v136 = vld [vmem:[#allocation2 + $0x228] sm:$0xff]
    %v137 = vld [vmem:[#allocation2 + $0x230] sm:$0xff]
    %v138 = vld [vmem:[#allocation2 + $0x238] sm:$0xff]
    %v139 = vld [vmem:[#allocation2 + $0x240] sm:$0xff]
    %v140 = vld [vmem:[#allocation2 + $0x248] sm:$0xff]
    %v141 = vld [vmem:[#allocation2 + $0x250] sm:$0xff]
    %v142 = vld [vmem:[#allocation2 + $0x258] sm:$0xff]
    %v143 = vld [vmem:[#allocation2 + $0x260] sm:$0xff]
    %v144 = vld [vmem:[#allocation2 + $0x268] sm:$0xff]
    %v145 = vld [vmem:[#allocation2 + $0x270] sm:$0xff]
    %v146 = vld [vmem:[#allocation2 + $0x278] sm:$0xff]
    %v147 = vld [vmem:[#allocation2 + $0x280] sm:$0xff]
    %v148 = vld [vmem:[#allocation2 + $0x288] sm:$0xff]
    %v149 = vld [vmem:[#allocation2 + $0x290] sm:$0xff]
    %v150 = vld [vmem:[#allocation2 + $0x298] sm:$0xff]
    %v151 = vld [vmem:[#allocation2 + $0x2a0] sm:$0xff]
    %v152 = vld [vmem:[#allocation2 + $0x2a8] sm:$0xff]
    %v153 = vld [vmem:[#allocation2 + $0x2b0] sm:$0xff]
    %v154 = vld [vmem:[#allocation2 + $0x2b8] sm:$0xff]
    %v155 = vld [vmem:[#allocation2 + $0x2c0] sm:$0xff]
    %v156 = vld [vmem:[#allocation2 + $0x2c8] sm:$0xff]
    %v157 = vld [vmem:[#allocation2 + $0x2d0] sm:$0xff]
    %v158 = vld [vmem:[#allocation2 + $0x2d8] sm:$0xff]
    %v159 = vld [vmem:[#allocation2 + $0x2e0] sm:$0xff]
    %v160 = vld [vmem:[#allocation2 + $0x2e8] sm:$0xff]
    %v161 = vld [vmem:[#allocation2 + $0x2f0] sm:$0xff]
    %v162 = vld [vmem:[#allocation2 + $0x2f8] sm:$0xff]
    %163 = vmatprep.subr.mxu0 0.0
    %164 = vmatpush1.msra.mxu0 %v82
    %165 = vmatprep.subr.mxu0 0.0
    %166 = vmatpush1.msra.mxu0 %v81
    %167 = vmatprep.subr.mxu0 0.0
    %168 = vmatpush1.msra.mxu0 %v80
    %169 = vmatprep.subr.mxu0 0.0
    %170 = vmatpush1.msra.mxu0 %v79
    %171 = vmatprep.subr.mxu0 0.0
    %172 = vmatpush1.msra.mxu0 %v78
    %173 = vmatprep.subr.mxu0 0.0
    %174 = vmatpush1.msra.mxu0 %v77
    %175 = vmatprep.subr.mxu0 0.0
    %176 = vmatpush1.msra.mxu0 %v76
    %177 = vmatprep.subr.mxu0 0.0
    %178 = vmatpush1.msra.mxu0 %v75
    %179 = vmatprep.subr.mxu0 0.0
    %180 = vmatpush1.msra.mxu0 %v74
    %181 = vmatprep.subr.mxu0 0.0
    %182 = vmatpush1.msra.mxu0 %v73
    %183 = vmatprep.subr.mxu0 0.0
    %184 = vmatpush1.msra.mxu0 %v72
    %185 = vmatprep.subr.mxu0 0.0
    %186 = vmatpush1.msra.mxu0 %v71
    %187 = vmatprep.subr.mxu0 0.0
    %188 = vmatpush1.msra.mxu0 %v70
    %189 = vmatprep.subr.mxu0 0.0
    %190 = vmatpush1.msra.mxu0 %v69
    %191 = vmatprep.subr.mxu0 0.0
    %192 = vmatpush1.msra.mxu0 %v68
    %193 = vmatprep.subr.mxu0 0.0
    %194 = vmatpush1.msra.mxu0 %v67
    %195 = vmatprep.subr.mxu0 0.0
    %196 = vmatpush2.msra.mxu0 %v98
    %197 = vmatprep.subr.mxu0 0.0
    %198 = vmatpush2.msra.mxu0 %v97
    %199 = vmatprep.subr.mxu0 0.0
    %200 = vmatpush2.msra.mxu0 %v96
    %201 = vmatprep.subr.mxu0 0.0
    %202 = vmatpush2.msra.mxu0 %v95
    %203 = vmatprep.subr.mxu0 0.0
    %204 = vmatpush2.msra.mxu0 %v94
    %205 = vmatprep.subr.mxu0 0.0
    %206 = vmatpush2.msra.mxu0 %v93
    %207 = vmatprep.subr.mxu0 0.0
    %208 = vmatpush2.msra.mxu0 %v92
    %209 = vmatprep.subr.mxu0 0.0
    %210 = vmatpush2.msra.mxu0 %v91
    %211 = vmatprep.subr.mxu0 0.0
    %212 = vmatpush2.msra.mxu0 %v90
    %213 = vmatprep.subr.mxu0 0.0
    %214 = vmatpush2.msra.mxu0 %v89
    %215 = vmatprep.subr.mxu0 0.0
    %216 = vmatpush2.msra.mxu0 %v88
    %217 = vmatprep.subr.mxu0 0.0
    %218 = vmatpush2.msra.mxu0 %v87
    %219 = vmatprep.subr.mxu0 0.0
    %220 = vmatpush2.msra.mxu0 %v86
    %221 = vmatprep.subr.mxu0 0.0
    %222 = vmatpush2.msra.mxu0 %v85
    %223 = vmatprep.subr.mxu0 0.0
    %224 = vmatpush2.msra.mxu0 %v84
    %225 = vmatprep.subr.mxu0 0.0
    %226 = vmatpush2.msra.mxu0 %v83
    %227 = vmatprep.mubr.f32.mxu0 %v62
    %228 = vmatmul.mubr.f32.gmra.mxu0 %v61
    %v229 = vpop.f32.mrf.mxu0
    %v230 = vadd.f32 0.0, %v229
    %v231 = vpop.f32.mrf.mxu0
    %232 = vdwg.mxu0
    %233 = vmatprep.subr.mxu0 0.0
    %234 = vmatpush1.msra.mxu0 %v114
    %235 = vmatprep.subr.mxu0 0.0
    %236 = vmatpush1.msra.mxu0 %v113
    %237 = vmatprep.subr.mxu0 0.0
    %238 = vmatpush1.msra.mxu0 %v112
    %239 = vmatprep.subr.mxu0 0.0
    %240 = vmatpush1.msra.mxu0 %v111
    %241 = vmatprep.subr.mxu0 0.0
    %242 = vmatpush1.msra.mxu0 %v110
    %243 = vmatprep.subr.mxu0 0.0
    %244 = vmatpush1.msra.mxu0 %v109
    %245 = vmatprep.subr.mxu0 0.0
    %246 = vmatpush1.msra.mxu0 %v108
    %247 = vmatprep.subr.mxu0 0.0
    %248 = vmatpush1.msra.mxu0 %v107
    %249 = vmatprep.subr.mxu0 0.0
    %250 = vmatpush1.msra.mxu0 %v106
    %251 = vmatprep.subr.mxu0 0.0
    %252 = vmatpush1.msra.mxu0 %v105
    %253 = vmatprep.subr.mxu0 0.0
    %254 = vmatpush1.msra.mxu0 %v104
    %255 = vmatprep.subr.mxu0 0.0
    %256 = vmatpush1.msra.mxu0 %v103
    %257 = vmatprep.subr.mxu0 0.0
    %258 = vmatpush1.msra.mxu0 %v102
    %259 = vmatprep.subr.mxu0 0.0
    %260 = vmatpush1.msra.mxu0 %v101
    %261 = vmatprep.subr.mxu0 0.0
    %262 = vmatpush1.msra.mxu0 %v100
    %263 = vmatprep.subr.mxu0 0.0
    %264 = vmatpush1.msra.mxu0 %v99
    %265 = vmatprep.subr.mxu0 0.0
    %266 = vmatpush2.msra.mxu0 %v130
    %267 = vmatprep.subr.mxu0 0.0
    %268 = vmatpush2.msra.mxu0 %v129
    %269 = vmatprep.subr.mxu0 0.0
    %270 = vmatpush2.msra.mxu0 %v128
    %271 = vmatprep.subr.mxu0 0.0
    %272 = vmatpush2.msra.mxu0 %v127
    %273 = vmatprep.subr.mxu0 0.0
    %274 = vmatpush2.msra.mxu0 %v126
    %275 = vmatprep.subr.mxu0 0.0
    %276 = vmatpush2.msra.mxu0 %v125
    %277 = vmatprep.subr.mxu0 0.0
    %278 = vmatpush2.msra.mxu0 %v124
    %279 = vmatprep.subr.mxu0 0.0
    %280 = vmatpush2.msra.mxu0 %v123
    %281 = vmatprep.subr.mxu0 0.0
    %282 = vmatpush2.msra.mxu0 %v122
    %283 = vmatprep.subr.mxu0 0.0
    %284 = vmatpush2.msra.mxu0 %v121
    %285 = vmatprep.subr.mxu0 0.0
    %286 = vmatpush2.msra.mxu0 %v120
    %287 = vmatprep.subr.mxu0 0.0
    %288 = vmatpush2.msra.mxu0 %v119
    %289 = vmatprep.subr.mxu0 0.0
    %290 = vmatpush2.msra.mxu0 %v118
    %291 = vmatprep.subr.mxu0 0.0
    %292 = vmatpush2.msra.mxu0 %v117
    %293 = vmatprep.subr.mxu0 0.0
    %294 = vmatpush2.msra.mxu0 %v116
    %295 = vmatprep.subr.mxu0 0.0
    %296 = vmatpush2.msra.mxu0 %v115
    %297 = vmatprep.mubr.f32.mxu0 %v64
    %298 = vmatmul.mubr.f32.gmra.mxu0 %v63
    %v299 = vpop.f32.mrf.mxu0
    %v300 = vadd.f32 %v230, %v299
    %v301 = vpop.f32.mrf.mxu0
    %302 = vdwg.mxu0
    %303 = vmatprep.subr.mxu0 0.0
    %304 = vmatpush1.msra.mxu0 %v146
    %305 = vmatprep.subr.mxu0 0.0
    %306 = vmatpush1.msra.mxu0 %v145
    %307 = vmatprep.subr.mxu0 0.0
    %308 = vmatpush1.msra.mxu0 %v144
    %309 = vmatprep.subr.mxu0 0.0
    %310 = vmatpush1.msra.mxu0 %v143
    %311 = vmatprep.subr.mxu0 0.0
    %312 = vmatpush1.msra.mxu0 %v142
    %313 = vmatprep.subr.mxu0 0.0
    %314 = vmatpush1.msra.mxu0 %v141
    %315 = vmatprep.subr.mxu0 0.0
    %316 = vmatpush1.msra.mxu0 %v140
    %317 = vmatprep.subr.mxu0 0.0
    %318 = vmatpush1.msra.mxu0 %v139
    %319 = vmatprep.subr.mxu0 0.0
    %320 = vmatpush1.msra.mxu0 %v138
    %321 = vmatprep.subr.mxu0 0.0
    %322 = vmatpush1.msra.mxu0 %v137
    %323 = vmatprep.subr.mxu0 0.0
    %324 = vmatpush1.msra.mxu0 %v136
    %325 = vmatprep.subr.mxu0 0.0
    %326 = vmatpush1.msra.mxu0 %v135
    %327 = vmatprep.subr.mxu0 0.0
    %328 = vmatpush1.msra.mxu0 %v134
    %329 = vmatprep.subr.mxu0 0.0
    %330 = vmatpush1.msra.mxu0 %v133
    %331 = vmatprep.subr.mxu0 0.0
    %332 = vmatpush1.msra.mxu0 %v132
    %333 = vmatprep.subr.mxu0 0.0
    %334 = vmatpush1.msra.mxu0 %v131
    %335 = vmatprep.subr.mxu0 0.0
    %336 = vmatpush2.msra.mxu0 %v162
    %337 = vmatprep.subr.mxu0 0.0
    %338 = vmatpush2.msra.mxu0 %v161
    %339 = vmatprep.subr.mxu0 0.0
    %340 = vmatpush2.msra.mxu0 %v160
    %341 = vmatprep.subr.mxu0 0.0
    %342 = vmatpush2.msra.mxu0 %v159
    %343 = vmatprep.subr.mxu0 0.0
    %344 = vmatpush2.msra.mxu0 %v158
    %345 = vmatprep.subr.mxu0 0.0
    %346 = vmatpush2.msra.mxu0 %v157
    %347 = vmatprep.subr.mxu0 0.0
    %348 = vmatpush2.msra.mxu0 %v156
    %349 = vmatprep.subr.mxu0 0.0
    %350 = vmatpush2.msra.mxu0 %v155
    %351 = vmatprep.subr.mxu0 0.0
    %352 = vmatpush2.msra.mxu0 %v154
    %353 = vmatprep.subr.mxu0 0.0
    %354 = vmatpush2.msra.mxu0 %v153
    %355 = vmatprep.subr.mxu0 0.0
    %356 = vmatpush2.msra.mxu0 %v152
    %357 = vmatprep.subr.mxu0 0.0
    %358 = vmatpush2.msra.mxu0 %v151
    %359 = vmatprep.subr.mxu0 0.0
    %360 = vmatpush2.msra.mxu0 %v150
    %361 = vmatprep.subr.mxu0 0.0
    %362 = vmatpush2.msra.mxu0 %v149
    %363 = vmatprep.subr.mxu0 0.0
    %364 = vmatpush2.msra.mxu0 %v148
    %365 = vmatprep.subr.mxu0 0.0
    %366 = vmatpush2.msra.mxu0 %v147
    %367 = vmatprep.mubr.f32.mxu0 %v66
    %368 = vmatmul.mubr.f32.gmra.mxu0 %v65
    %v369 = vpop.f32.mrf.mxu0
    %v370 = vadd.f32 %v300, %v369
    %v371 = vpop.f32.mrf.mxu0
    %372 = vdwg.mxu0
    %v373 = vld [vmem:[#allocation5] sm:$0xff]
    %v374 = vld [vmem:[#allocation5 + $0x8] sm:$0xff]
    %v375 = vld [vmem:[#allocation5 + $0x10] sm:$0xff]
    %v376 = vld [vmem:[#allocation5 + $0x18] sm:$0xff]
    %v377 = vld [vmem:[#allocation5 + $0x20] sm:$0xff]
    %v378 = vld [vmem:[#allocation5 + $0x28] sm:$0xff]
    %v379 = vld [vmem:[#allocation5 + $0x30] sm:$0xff]
    %v380 = vld [vmem:[#allocation5 + $0x38] sm:$0xff]
    %v381 = vld [vmem:[#allocation5 + $0x40] sm:$0xff]
    %v382 = vld [vmem:[#allocation5 + $0x48] sm:$0xff]
    %v383 = vld [vmem:[#allocation5 + $0x50] sm:$0xff]
    %v384 = vld [vmem:[#allocation5 + $0x58] sm:$0xff]
    %v385 = vld [vmem:[#allocation5 + $0x60] sm:$0xff]
    %v386 = vld [vmem:[#allocation5 + $0x68] sm:$0xff]
    %v387 = vld [vmem:[#allocation5 + $0x70] sm:$0xff]
    %v388 = vld [vmem:[#allocation5 + $0x78] sm:$0xff]
    %v389 = vld [vmem:[#allocation5 + $0x80] sm:$0xff]
    %v390 = vld [vmem:[#allocation5 + $0x88] sm:$0xff]
    %v391 = vld [vmem:[#allocation5 + $0x90] sm:$0xff]
    %v392 = vld [vmem:[#allocation5 + $0x98] sm:$0xff]
    %v393 = vld [vmem:[#allocation5 + $0xa0] sm:$0xff]
    %v394 = vld [vmem:[#allocation5 + $0xa8] sm:$0xff]
    %v395 = vld [vmem:[#allocation5 + $0xb0] sm:$0xff]
    %v396 = vld [vmem:[#allocation5 + $0xb8] sm:$0xff]
    %v397 = vld [vmem:[#allocation5 + $0xc0] sm:$0xff]
    %v398 = vld [vmem:[#allocation5 + $0xc8] sm:$0xff]
    %v399 = vld [vmem:[#allocation5 + $0xd0] sm:$0xff]
    %v400 = vld [vmem:[#allocation5 + $0xd8] sm:$0xff]
    %v401 = vld [vmem:[#allocation5 + $0xe0] sm:$0xff]
    %v402 = vld [vmem:[#allocation5 + $0xe8] sm:$0xff]
    %v403 = vld [vmem:[#allocation5 + $0xf0] sm:$0xff]
    %v404 = vld [vmem:[#allocation5 + $0xf8] sm:$0xff]
    %v405 = vld [vmem:[#allocation5 + $0x100] sm:$0xff]
    %v406 = vld [vmem:[#allocation5 + $0x108] sm:$0xff]
    %v407 = vld [vmem:[#allocation5 + $0x110] sm:$0xff]
    %v408 = vld [vmem:[#allocation5 + $0x118] sm:$0xff]
    %v409 = vld [vmem:[#allocation5 + $0x120] sm:$0xff]
    %v410 = vld [vmem:[#allocation5 + $0x128] sm:$0xff]
    %v411 = vld [vmem:[#allocation5 + $0x130] sm:$0xff]
    %v412 = vld [vmem:[#allocation5 + $0x138] sm:$0xff]
    %v413 = vld [vmem:[#allocation5 + $0x140] sm:$0xff]
    %v414 = vld [vmem:[#allocation5 + $0x148] sm:$0xff]
    %v415 = vld [vmem:[#allocation5 + $0x150] sm:$0xff]
    %v416 = vld [vmem:[#allocation5 + $0x158] sm:$0xff]
    %v417 = vld [vmem:[#allocation5 + $0x160] sm:$0xff]
    %v418 = vld [vmem:[#allocation5 + $0x168] sm:$0xff]
    %v419 = vld [vmem:[#allocation5 + $0x170] sm:$0xff]
    %v420 = vld [vmem:[#allocation5 + $0x178] sm:$0xff]
    %v421 = vld [vmem:[#allocation5 + $0x180] sm:$0xff]
    %v422 = vld [vmem:[#allocation5 + $0x188] sm:$0xff]
    %v423 = vld [vmem:[#allocation5 + $0x190] sm:$0xff]
    %v424 = vld [vmem:[#allocation5 + $0x198] sm:$0xff]
    %v425 = vld [vmem:[#allocation5 + $0x1a0] sm:$0xff]
    %v426 = vld [vmem:[#allocation5 + $0x1a8] sm:$0xff]
    %v427 = vld [vmem:[#allocation5 + $0x1b0] sm:$0xff]
    %v428 = vld [vmem:[#allocation5 + $0x1b8] sm:$0xff]
    %v429 = vld [vmem:[#allocation5 + $0x1c0] sm:$0xff]
    %v430 = vld [vmem:[#allocation5 + $0x1c8] sm:$0xff]
    %v431 = vld [vmem:[#allocation5 + $0x1d0] sm:$0xff]
    %v432 = vld [vmem:[#allocation5 + $0x1d8] sm:$0xff]
    %v433 = vld [vmem:[#allocation5 + $0x1e0] sm:$0xff]
    %v434 = vld [vmem:[#allocation5 + $0x1e8] sm:$0xff]
    %v435 = vld [vmem:[#allocation5 + $0x1f0] sm:$0xff]
    %v436 = vld [vmem:[#allocation5 + $0x1f8] sm:$0xff]
    %v437 = vld [vmem:[#allocation5 + $0x200] sm:$0xff]
    %v438 = vld [vmem:[#allocation5 + $0x208] sm:$0xff]
    %v439 = vld [vmem:[#allocation5 + $0x210] sm:$0xff]
    %v440 = vld [vmem:[#allocation5 + $0x218] sm:$0xff]
    %v441 = vld [vmem:[#allocation5 + $0x220] sm:$0xff]
    %v442 = vld [vmem:[#allocation5 + $0x228] sm:$0xff]
    %v443 = vld [vmem:[#allocation5 + $0x230] sm:$0xff]
    %v444 = vld [vmem:[#allocation5 + $0x238] sm:$0xff]
    %v445 = vld [vmem:[#allocation5 + $0x240] sm:$0xff]
    %v446 = vld [vmem:[#allocation5 + $0x248] sm:$0xff]
    %v447 = vld [vmem:[#allocation5 + $0x250] sm:$0xff]
    %v448 = vld [vmem:[#allocation5 + $0x258] sm:$0xff]
    %v449 = vld [vmem:[#allocation5 + $0x260] sm:$0xff]
    %v450 = vld [vmem:[#allocation5 + $0x268] sm:$0xff]
    %v451 = vld [vmem:[#allocation5 + $0x270] sm:$0xff]
    %v452 = vld [vmem:[#allocation5 + $0x278] sm:$0xff]
    %v453 = vld [vmem:[#allocation5 + $0x280] sm:$0xff]
    %v454 = vld [vmem:[#allocation5 + $0x288] sm:$0xff]
    %v455 = vld [vmem:[#allocation5 + $0x290] sm:$0xff]
    %v456 = vld [vmem:[#allocation5 + $0x298] sm:$0xff]
    %v457 = vld [vmem:[#allocation5 + $0x2a0] sm:$0xff]
    %v458 = vld [vmem:[#allocation5 + $0x2a8] sm:$0xff]
    %v459 = vld [vmem:[#allocation5 + $0x2b0] sm:$0xff]
    %v460 = vld [vmem:[#allocation5 + $0x2b8] sm:$0xff]
    %v461 = vld [vmem:[#allocation5 + $0x2c0] sm:$0xff]
    %v462 = vld [vmem:[#allocation5 + $0x2c8] sm:$0xff]
    %v463 = vld [vmem:[#allocation5 + $0x2d0] sm:$0xff]
    %v464 = vld [vmem:[#allocation5 + $0x2d8] sm:$0xff]
    %v465 = vld [vmem:[#allocation5 + $0x2e0] sm:$0xff]
    %v466 = vld [vmem:[#allocation5 + $0x2e8] sm:$0xff]
    %v467 = vld [vmem:[#allocation5 + $0x2f0] sm:$0xff]
    %v468 = vld [vmem:[#allocation5 + $0x2f8] sm:$0xff]
    %v469 = vld [vmem:[%s3] sm:$0x3f]
    %v471 = vlaneseq
    %v472 = vshrl.u32 %v471, 7
    %v473 = vsub.s32 0, %v472
    %v474 = vrot.slane %v469, %v473
    %v475 = vlaneseq
    %v476 = vshrl.u32 %v475, 7
    %v477 = vsub.s32 1, %v476
    %v478 = vrot.slane %v469, %v477
    %v479 = vlaneseq
    %v480 = vshrl.u32 %v479, 7
    %v481 = vsub.s32 2, %v480
    %v482 = vrot.slane %v469, %v481
    %v483 = vlaneseq
    %v484 = vshrl.u32 %v483, 7
    %v485 = vsub.s32 3, %v484
    %v486 = vrot.slane %v469, %v485
    %v487 = vlaneseq
    %v488 = vshrl.u32 %v487, 7
    %v489 = vsub.s32 4, %v488
    %v490 = vrot.slane %v469, %v489
    %v491 = vlaneseq
    %v492 = vshrl.u32 %v491, 7
    %v493 = vsub.s32 5, %v492
    %v494 = vrot.slane %v469, %v493
    %501 = vmatprep.subr.mxu0 %v464
    %502 = vmatpush1.msra.mxu0 %v463
    %503 = vmatprep.subr.mxu0 %v458
    %504 = vmatpush1.msra.mxu0 %v457
    %505 = vmatprep.subr.mxu0 %v452
    %506 = vmatpush1.msra.mxu0 %v451
    %507 = vmatprep.subr.mxu0 %v446
    %508 = vmatpush1.msra.mxu0 %v445
    %509 = vmatprep.subr.mxu0 %v440
    %510 = vmatpush1.msra.mxu0 %v439
    %511 = vmatprep.subr.mxu0 %v434
    %512 = vmatpush1.msra.mxu0 %v433
    %513 = vmatprep.subr.mxu0 %v428
    %514 = vmatpush1.msra.mxu0 %v427
    %515 = vmatprep.subr.mxu0 %v422
    %516 = vmatpush1.msra.mxu0 %v421
    %517 = vmatprep.subr.mxu0 %v416
    %518 = vmatpush1.msra.mxu0 %v415
    %519 = vmatprep.subr.mxu0 %v410
    %520 = vmatpush1.msra.mxu0 %v409
    %521 = vmatprep.subr.mxu0 %v404
    %522 = vmatpush1.msra.mxu0 %v403
    %523 = vmatprep.subr.mxu0 %v398
    %524 = vmatpush1.msra.mxu0 %v397
    %525 = vmatprep.subr.mxu0 %v392
    %526 = vmatpush1.msra.mxu0 %v391
    %527 = vmatprep.subr.mxu0 %v386
    %528 = vmatpush1.msra.mxu0 %v385
    %529 = vmatprep.subr.mxu0 %v380
    %530 = vmatpush1.msra.mxu0 %v379
    %531 = vmatprep.subr.mxu0 %v374
    %532 = vmatpush1.msra.mxu0 %v373
    %533 = vmatprep.subr.mxu0 0.0
    %534 = vmatpush2.msra.mxu0 0.0
    %535 = vmatprep.subr.mxu0 0.0
    %536 = vmatpush2.msra.mxu0 0.0
    %537 = vmatprep.subr.mxu0 0.0
    %538 = vmatpush2.msra.mxu0 0.0
    %539 = vmatprep.subr.mxu0 0.0
    %540 = vmatpush2.msra.mxu0 0.0
    %541 = vmatprep.subr.mxu0 0.0
    %542 = vmatpush2.msra.mxu0 0.0
    %543 = vmatprep.subr.mxu0 0.0
    %544 = vmatpush2.msra.mxu0 0.0
    %545 = vmatprep.subr.mxu0 0.0
    %546 = vmatpush2.msra.mxu0 0.0
    %547 = vmatprep.subr.mxu0 0.0
    %548 = vmatpush2.msra.mxu0 0.0
    %549 = vmatprep.subr.mxu0 0.0
    %550 = vmatpush2.msra.mxu0 0.0
    %551 = vmatprep.subr.mxu0 0.0
    %552 = vmatpush2.msra.mxu0 0.0
    %553 = vmatprep.subr.mxu0 0.0
    %554 = vmatpush2.msra.mxu0 0.0
    %555 = vmatprep.subr.mxu0 0.0
    %556 = vmatpush2.msra.mxu0 0.0
    %557 = vmatprep.subr.mxu0 0.0
    %558 = vmatpush2.msra.mxu0 0.0
    %559 = vmatprep.subr.mxu0 0.0
    %560 = vmatpush2.msra.mxu0 0.0
    %561 = vmatprep.subr.mxu0 0.0
    %562 = vmatpush2.msra.mxu0 0.0
    %563 = vmatprep.subr.mxu0 0.0
    %564 = vmatpush2.msra.mxu0 0.0
    %565 = vmatprep.mubr.f32.mxu0 0.0
    %566 = vmatmul.mubr.f32.gmra.mxu0 %v370
    %v567 = vpop.f32.mrf.mxu0
    %v568 = vadd.f32 %v474, %v567
    %v569 = vpop.f32.mrf.mxu0
    %v570 = vadd.f32 %v478, %v569
    %571 = vdwg.mxu0
    %572 = vmatprep.subr.mxu0 %v466
    %573 = vmatpush1.msra.mxu0 %v465
    %574 = vmatprep.subr.mxu0 %v460
    %575 = vmatpush1.msra.mxu0 %v459
    %576 = vmatprep.subr.mxu0 %v454
    %577 = vmatpush1.msra.mxu0 %v453
    %578 = vmatprep.subr.mxu0 %v448
    %579 = vmatpush1.msra.mxu0 %v447
    %580 = vmatprep.subr.mxu0 %v442
    %581 = vmatpush1.msra.mxu0 %v441
    %582 = vmatprep.subr.mxu0 %v436
    %583 = vmatpush1.msra.mxu0 %v435
    %584 = vmatprep.subr.mxu0 %v430
    %585 = vmatpush1.msra.mxu0 %v429
    %586 = vmatprep.subr.mxu0 %v424
    %587 = vmatpush1.msra.mxu0 %v423
    %588 = vmatprep.subr.mxu0 %v418
    %589 = vmatpush1.msra.mxu0 %v417
    %590 = vmatprep.subr.mxu0 %v412
    %591 = vmatpush1.msra.mxu0 %v411
    %592 = vmatprep.subr.mxu0 %v406
    %593 = vmatpush1.msra.mxu0 %v405
    %594 = vmatprep.subr.mxu0 %v400
    %595 = vmatpush1.msra.mxu0 %v399
    %596 = vmatprep.subr.mxu0 %v394
    %597 = vmatpush1.msra.mxu0 %v393
    %598 = vmatprep.subr.mxu0 %v388
    %599 = vmatpush1.msra.mxu0 %v387
    %600 = vmatprep.subr.mxu0 %v382
    %601 = vmatpush1.msra.mxu0 %v381
    %602 = vmatprep.subr.mxu0 %v376
    %603 = vmatpush1.msra.mxu0 %v375
    %604 = vmatprep.subr.mxu0 0.0
    %605 = vmatpush2.msra.mxu0 0.0
    %606 = vmatprep.subr.mxu0 0.0
    %607 = vmatpush2.msra.mxu0 0.0
    %608 = vmatprep.subr.mxu0 0.0
    %609 = vmatpush2.msra.mxu0 0.0
    %610 = vmatprep.subr.mxu0 0.0
    %611 = vmatpush2.msra.mxu0 0.0
    %612 = vmatprep.subr.mxu0 0.0
    %613 = vmatpush2.msra.mxu0 0.0
    %614 = vmatprep.subr.mxu0 0.0
    %615 = vmatpush2.msra.mxu0 0.0
    %616 = vmatprep.subr.mxu0 0.0
    %617 = vmatpush2.msra.mxu0 0.0
    %618 = vmatprep.subr.mxu0 0.0
    %619 = vmatpush2.msra.mxu0 0.0
    %620 = vmatprep.subr.mxu0 0.0
    %621 = vmatpush2.msra.mxu0 0.0
    %622 = vmatprep.subr.mxu0 0.0
    %623 = vmatpush2.msra.mxu0 0.0
    %624 = vmatprep.subr.mxu0 0.0
    %625 = vmatpush2.msra.mxu0 0.0
    %626 = vmatprep.subr.mxu0 0.0
    %627 = vmatpush2.msra.mxu0 0.0
    %628 = vmatprep.subr.mxu0 0.0
    %629 = vmatpush2.msra.mxu0 0.0
    %630 = vmatprep.subr.mxu0 0.0
    %631 = vmatpush2.msra.mxu0 0.0
    %632 = vmatprep.subr.mxu0 0.0
    %633 = vmatpush2.msra.mxu0 0.0
    %634 = vmatprep.subr.mxu0 0.0
    %635 = vmatpush2.msra.mxu0 0.0
    %636 = vmatprep.mubr.f32.mxu0 0.0
    %637 = vmatmul.mubr.f32.gmra.mxu0 %v370
    %v638 = vpop.f32.mrf.mxu0
    %v639 = vadd.f32 %v482, %v638
    %v640 = vpop.f32.mrf.mxu0
    %v641 = vadd.f32 %v486, %v640
    %642 = vdwg.mxu0
    %643 = vmatprep.subr.mxu0 %v468
    %644 = vmatpush1.msra.mxu0 %v467
    %645 = vmatprep.subr.mxu0 %v462
    %646 = vmatpush1.msra.mxu0 %v461
    %647 = vmatprep.subr.mxu0 %v456
    %648 = vmatpush1.msra.mxu0 %v455
    %649 = vmatprep.subr.mxu0 %v450
    %650 = vmatpush1.msra.mxu0 %v449
    %651 = vmatprep.subr.mxu0 %v444
    %652 = vmatpush1.msra.mxu0 %v443
    %653 = vmatprep.subr.mxu0 %v438
    %654 = vmatpush1.msra.mxu0 %v437
    %655 = vmatprep.subr.mxu0 %v432
    %656 = vmatpush1.msra.mxu0 %v431
    %657 = vmatprep.subr.mxu0 %v426
    %658 = vmatpush1.msra.mxu0 %v425
    %659 = vmatprep.subr.mxu0 %v420
    %660 = vmatpush1.msra.mxu0 %v419
    %661 = vmatprep.subr.mxu0 %v414
    %662 = vmatpush1.msra.mxu0 %v413
    %663 = vmatprep.subr.mxu0 %v408
    %664 = vmatpush1.msra.mxu0 %v407
    %665 = vmatprep.subr.mxu0 %v402
    %666 = vmatpush1.msra.mxu0 %v401
    %667 = vmatprep.subr.mxu0 %v396
    %668 = vmatpush1.msra.mxu0 %v395
    %669 = vmatprep.subr.mxu0 %v390
    %670 = vmatpush1.msra.mxu0 %v389
    %671 = vmatprep.subr.mxu0 %v384
    %672 = vmatpush1.msra.mxu0 %v383
    %673 = vmatprep.subr.mxu0 %v378
    %674 = vmatpush1.msra.mxu0 %v377
    %675 = vmatprep.subr.mxu0 0.0
    %676 = vmatpush2.msra.mxu0 0.0
    %677 = vmatprep.subr.mxu0 0.0
    %678 = vmatpush2.msra.mxu0 0.0
    %679 = vmatprep.subr.mxu0 0.0
    %680 = vmatpush2.msra.mxu0 0.0
    %681 = vmatprep.subr.mxu0 0.0
    %682 = vmatpush2.msra.mxu0 0.0
    %683 = vmatprep.subr.mxu0 0.0
    %684 = vmatpush2.msra.mxu0 0.0
    %685 = vmatprep.subr.mxu0 0.0
    %686 = vmatpush2.msra.mxu0 0.0
    %687 = vmatprep.subr.mxu0 0.0
    %688 = vmatpush2.msra.mxu0 0.0
    %689 = vmatprep.subr.mxu0 0.0
    %690 = vmatpush2.msra.mxu0 0.0
    %691 = vmatprep.subr.mxu0 0.0
    %692 = vmatpush2.msra.mxu0 0.0
    %693 = vmatprep.subr.mxu0 0.0
    %694 = vmatpush2.msra.mxu0 0.0
    %695 = vmatprep.subr.mxu0 0.0
    %696 = vmatpush2.msra.mxu0 0.0
    %697 = vmatprep.subr.mxu0 0.0
    %698 = vmatpush2.msra.mxu0 0.0
    %699 = vmatprep.subr.mxu0 0.0
    %700 = vmatpush2.msra.mxu0 0.0
    %701 = vmatprep.subr.mxu0 0.0
    %702 = vmatpush2.msra.mxu0 0.0
    %703 = vmatprep.subr.mxu0 0.0
    %704 = vmatpush2.msra.mxu0 0.0
    %705 = vmatprep.subr.mxu0 0.0
    %706 = vmatpush2.msra.mxu0 0.0
    %707 = vmatprep.mubr.f32.mxu0 0.0
    %708 = vmatmul.mubr.f32.gmra.mxu0 %v370
    %v709 = vpop.f32.mrf.mxu0
    %v710 = vadd.f32 %v490, %v709
    %v711 = vpop.f32.mrf.mxu0
    %v712 = vadd.f32 %v494, %v711
    %713 = vdwg.mxu0
    %714 = vrot.lane.b32.xlu0 %v568, 1
    %v715 = vpop.permute.xlu0 %714
    %716 = vrot.lane.b32.xlu0 %v570, 1
    %v717 = vpop.permute.xlu0 %716
    %718 = vrot.lane.b32.xlu0 %v639, 1
    %v719 = vpop.permute.xlu0 %718
    %720 = vrot.lane.b32.xlu0 %v641, 1
    %v721 = vpop.permute.xlu0 %720
    %722 = vrot.lane.b32.xlu0 %v710, 1
    %v723 = vpop.permute.xlu0 %722
    %724 = vrot.lane.b32.xlu0 %v712, 1
    %v725 = vpop.permute.xlu0 %724
    %v726 = vlaneseq
    %v727 = vand.u32 %v726, 127
    %vm728 = vcmp.lt.s32.totalorder %v727, 1
    %v729 = vsel %vm728, %v723, %v725
    %v730 = vsel %vm728, %v721, %v723
    %v731 = vsel %vm728, %v719, %v721
    %v732 = vsel %vm728, %v717, %v719
    %v733 = vsel %vm728, %v715, %v717
    %v734 = vsel %vm728, %v725, %v715
    %735 = vrot.lane.b32.xlu0 %v568, 127
    %v736 = vpop.permute.xlu0 %735
    %737 = vrot.lane.b32.xlu0 %v570, 127
    %v738 = vpop.permute.xlu0 %737
    %739 = vrot.lane.b32.xlu0 %v639, 127
    %v740 = vpop.permute.xlu0 %739
    %741 = vrot.lane.b32.xlu0 %v641, 127
    %v742 = vpop.permute.xlu0 %741
    %743 = vrot.lane.b32.xlu0 %v710, 127
    %v744 = vpop.permute.xlu0 %743
    %745 = vrot.lane.b32.xlu0 %v712, 127
    %v746 = vpop.permute.xlu0 %745
    %vm747 = vcmp.lt.s32.totalorder %v727, 127
    %v748 = vsel %vm747, %v744, %v746
    %v749 = vsel %vm747, %v742, %v744
    %v750 = vsel %vm747, %v740, %v742
    %v751 = vsel %vm747, %v738, %v740
    %v752 = vsel %vm747, %v736, %v738
    %v753 = vsel %vm747, %v746, %v736
    %v754 = vmax.f32 %v734, %v752
    %v755 = vmax.f32 %v733, %v751
    %v756 = vmax.f32 %v732, %v750
    %v757 = vmax.f32 %v731, %v749
    %v758 = vmax.f32 %v730, %v748
    %v759 = vmax.f32 %v729, %v753
    %v760 = vmax.f32 %v568, %v754
    %v761 = vmax.f32 %v570, %v755
    %v762 = vmax.f32 %v639, %v756
    %v763 = vmax.f32 %v641, %v757
    %v764 = vmax.f32 %v710, %v758
    %v765 = vmax.f32 %v712, %v759
    %766 = vrot.lane.b32.xlu0 %v760, 16
    %v767 = vpop.permute.xlu0 %766
    %768 = vrot.lane.b32.xlu0 %v761, 16
    %v769 = vpop.permute.xlu0 %768
    %770 = vrot.lane.b32.xlu0 %v762, 16
    %v771 = vpop.permute.xlu0 %770
    %772 = vrot.lane.b32.xlu0 %v763, 16
    %v773 = vpop.permute.xlu0 %772
    %774 = vrot.lane.b32.xlu0 %v764, 16
    %v775 = vpop.permute.xlu0 %774
    %776 = vrot.lane.b32.xlu0 %v765, 16
    %v777 = vpop.permute.xlu0 %776
    %vm778 = vcmp.lt.s32.totalorder %v727, 16
    %v779 = vsel %vm778, %v775, %v777
    %v780 = vsel %vm778, %v773, %v775
    %v781 = vsel %vm778, %v771, %v773
    %v782 = vsel %vm778, %v769, %v771
    %v783 = vsel %vm778, %v767, %v769
    %v784 = vsel %vm778, %v777, %v767
    %785 = vrot.lane.b32.xlu0 %v760, 112
    %v786 = vpop.permute.xlu0 %785
    %787 = vrot.lane.b32.xlu0 %v761, 112
    %v788 = vpop.permute.xlu0 %787
    %789 = vrot.lane.b32.xlu0 %v762, 112
    %v790 = vpop.permute.xlu0 %789
    %791 = vrot.lane.b32.xlu0 %v763, 112
    %v792 = vpop.permute.xlu0 %791
    %793 = vrot.lane.b32.xlu0 %v764, 112
    %v794 = vpop.permute.xlu0 %793
    %795 = vrot.lane.b32.xlu0 %v765, 112
    %v796 = vpop.permute.xlu0 %795
    %vm797 = vcmp.lt.s32.totalorder %v727, 112
    %v798 = vsel %vm797, %v794, %v796
    %v799 = vsel %vm797, %v792, %v794
    %v800 = vsel %vm797, %v790, %v792
    %v801 = vsel %vm797, %v788, %v790
    %v802 = vsel %vm797, %v786, %v788
    %v803 = vsel %vm797, %v796, %v786
    %v804 = vmax.f32 %v784, %v802
    %v805 = vmax.f32 %v783, %v801
    %v806 = vmax.f32 %v782, %v800
    %v807 = vmax.f32 %v781, %v799
    %v808 = vmax.f32 %v780, %v798
    %v809 = vmax.f32 %v779, %v803
    %v810 = vmax.f32 %v760, %v804
    %v811 = vmax.f32 %v761, %v805
    %v812 = vmax.f32 %v762, %v806
    %v813 = vmax.f32 %v763, %v807
    %v814 = vmax.f32 %v764, %v808
    %v815 = vmax.f32 %v765, %v809
    %s816 = sld [smem:[#allocation7]]
    %s817 = sld [smem:[#allocation7 + $0x1]]
    %s818 = sld [smem:[#allocation7 + $0x2]]
    %s819 = sld [smem:[#allocation7 + $0x3]]
    %v820 = vstv %s816
    %v821 = vmul.f32 %v820, %v810
    %v822 = vmul.f32 %v820, %v811
    %v823 = vstv %s817
    %v824 = vmul.f32 %v823, %v812
    %v825 = vmul.f32 %v823, %v813
    %v826 = vadd.f32 %v821, %v824
    %v827 = vadd.f32 %v822, %v825
    %v828 = vstv %s818
    %v829 = vmul.f32 %v828, %v814
    %v830 = vmul.f32 %v828, %v815
    %v831 = vadd.f32 %v826, %v829
    %v832 = vadd.f32 %v827, %v830
    %v833 = vstv %s819
    %v834 = vadd.f32 %v831, %v833
    %v835 = vadd.f32 %v832, %v833
    %836 = vst [vmem:[%s5] sm:$0xff] %v834
    %837 = vst [vmem:[%s5 + $0x8] sm:$0xff] %v835
    // Predicated region
    $region34: #{model2_forward.1} parent=1 // pred_check
      _
    $region35: #{model2_forward.1} parent=1 // pred_check_branch
      %839 = sbr.rel (0) target = $region37
    $region36: #{model2_forward.1} parent=1 // pred_region
      _
    $region37: #{model2_forward.1} parent=1 // pred_fallthru
      _
    // Predicated region
    $region38: #{model2_forward.1} parent=1 // pred_check
      _
    $region39: #{model2_forward.1} parent=1 // pred_check_branch
      %841 = sbr.rel (0) target = $region41
    $region40: #{model2_forward.1} parent=1 // pred_region
      _
    $region41: #{model2_forward.1} parent=1 // pred_fallthru
      _
    %842 = vsyncpa [#allocation3], 1
    %843 = vsyncpa [#allocation6], 1
    %844 = vsyncpa [#allocation4], 1

</llo_original>
